<compile_context>
chip_gen: v7x
topology: tpu7x:2x2x1
jax: 0.10.0
libtpu: 0.0.40
codegen_flags: <defaults>
</compile_context>

<pallas_src>
import functools

import jax
import jax.numpy as jnp
import numpy as np
from jax import lax
from jax.experimental import pallas as pl
from jax.experimental.pallas import tpu as pltpu


# ----------------------------------------------------------------------------
# Fused Pallas kernel: upsample + pad + concat + (conv3x3 -> BN -> ReLU) x 2
# ----------------------------------------------------------------------------
def _up_double_conv_kernel(x2_ref, x1_ref, m_ref, w1_ref, b1_ref,
                           w2_ref, b2_ref, o_ref, *, H, W):
    # x2_ref : (1, C2, HW)          skip connection, flattened NCHW
    # x1_ref : (1, C1, hw_in)       coarse features, flattened NCHW
    # m_ref  : (hw_in, HW)          bilinear-upsample + F.pad interpolation mat
    # w1_ref : (Cmid_p, 9*Cin)      conv1 weights, BN1 scale folded, transposed
    # b1_ref : (Cmid_p, 1)          folded BN1 bias
    # w2_ref : (Cout_p, 9*Cmid_p)   conv2 weights, BN2 scale folded, transposed
    # b2_ref : (Cout_p, 1)          folded BN2 bias
    # o_ref  : (1, Cout_p, HW)      output, flattened NCHW (lane-dense store)
    HW = H * W

    # ---- bilinear x2 upsample + F.pad of x1: one tiny interpolation matmul --
    x1_up = jnp.dot(x1_ref[0], m_ref[...],
                    preferred_element_type=jnp.float32)            # (C1, HW)

    # ---- channel concat (== torch.cat([x2, x1], dim=1)), in registers ----
    x_cat = jnp.concatenate([x2_ref[0], x1_up], axis=0)            # (Cin, HW)

    # ---- 3x3 tap border masks on the flattened row-major spatial axis ----
    lane = lax.broadcasted_iota(jnp.int32, (1, HW), 1)
    col = lane % W

    def tap_mask(dy, dx):
        m = None
        if dy == -1:
            m = lane >= W
        elif dy == 1:
            m = lane < (H - 1) * W
        if dx == -1:
            c = col >= 1
            m = c if m is None else jnp.logical_and(m, c)
        elif dx == 1:
            c = col <= W - 2
            m = c if m is None else jnp.logical_and(m, c)
        return None if m is None else m.astype(jnp.float32)

    offs = [(dy, dx) for dy in (-1, 0, 1) for dx in (-1, 0, 1)]
    masks = [tap_mask(dy, dx) for dy, dx in offs]
    shifts = [(-(dy * W + dx)) % HW for dy, dx in offs]

    def im2col(x):
        # (C, HW) -> (9*C, HW): lane-dense XLU rolls + border masks.
        # No padded scratch, no unaligned slices, no relayout reshapes.
        pieces = []
        for s, m in zip(shifts, masks):
            t = pltpu.roll(x, s, axis=1) if s else x
            pieces.append(t if m is None else t * m)
        return jnp.concatenate(pieces, axis=0)

    # ---- conv1 + BN1 + ReLU : one (Cmid_p, 9*Cin) x (9*Cin, HW) matmul ----
    h = jnp.dot(w1_ref[...], im2col(x_cat),
                preferred_element_type=jnp.float32) + b1_ref[...]
    h = jnp.maximum(h, 0.0)                                        # (Cmid_p, HW)

    # ---- conv2 + BN2 + ReLU, fed directly from the lane-dense intermediate --
    out = jnp.dot(w2_ref[...], im2col(h),
                  preferred_element_type=jnp.float32) + b2_ref[...]
    o_ref[0] = jnp.maximum(out, 0.0).astype(o_ref.dtype)


# ----------------------------------------------------------------------------
# Constant interpolation matrix: bilinear x2 upsample (align_corners) + F.pad
# ----------------------------------------------------------------------------
def _interp_matrix_axis(in_size, out_size):
    U = np.zeros((out_size, in_size), np.float32)
    if out_size == 1 or in_size == 1:
        src = np.zeros((out_size,), np.float64)
    else:
        src = np.arange(out_size, dtype=np.float64) * (in_size - 1) / (out_size - 1)
    i0 = np.clip(np.floor(src).astype(np.int64), 0, in_size - 1)
    i1 = np.minimum(i0 + 1, in_size - 1)
    frac = (src - i0).astype(np.float32)
    for o in range(out_size):
        U[o, i0[o]] += 1.0 - frac[o]
        U[o, i1[o]] += frac[o]
    return U


def _pad_or_crop_rows(U, pad_before, pad_after):
    # F.pad semantics: negative pad == crop
    if pad_before < 0:
        U = U[-pad_before:, :]
        pad_before = 0
    if pad_after < 0:
        U = U[:U.shape[0] + pad_after, :]
        pad_after = 0
    return np.concatenate(
        [np.zeros((pad_before, U.shape[1]), U.dtype), U,
         np.zeros((pad_after, U.shape[1]), U.dtype)], axis=0)


def _upsample_pad_matrix(h_in, w_in, H, W):
    Uy = _interp_matrix_axis(h_in, 2 * h_in)
    Ux = _interp_matrix_axis(w_in, 2 * w_in)
    dy, dx = H - 2 * h_in, W - 2 * w_in
    Uy = _pad_or_crop_rows(Uy, dy // 2, dy - dy // 2)   # (H, h_in)
    Ux = _pad_or_crop_rows(Ux, dx // 2, dx - dx // 2)   # (W, w_in)
    # M[y*W+x, i*w_in+j] = Uy[y,i]*Ux[x,j]
    return np.kron(Uy, Ux)                              # (H*W, h_in*w_in)


# ----------------------------------------------------------------------------
# JAX glue
# ----------------------------------------------------------------------------
def _fold_bn(gamma, beta, mean, var, eps=1e-5):
    scale = gamma / jnp.sqrt(var + eps)
    return scale, beta - mean * scale


def _round_up(x, m):
    return (x + m - 1) // m * m


def up_forward(params, x1_nchw, x2_nchw):
    """Forward pass of Up(in_channels, out_channels). NCHW in, NCHW out."""
    N, C2, H, W = x2_nchw.shape
    _, C1, h_in, w_in = x1_nchw.shape
    Cin = C2 + C1
    Cmid = params["w1"].shape[-1]
    Cout = params["w2"].shape[-1]
    Cmid_p = _round_up(Cmid, 8)     # sublane quantum -> unmasked matmul results
    Cout_p = _round_up(Cout, 8)     # sublane quantum -> unmasked output store
    HW, hw_in = H * W, h_in * w_in

    # Upsample + F.pad folded into a trace-time constant matrix (transposed so
    # the in-kernel matmul is a plain jnp.dot producing a lane-dense (C1, HW)).
    m_mat = jnp.asarray(_upsample_pad_matrix(h_in, w_in, H, W).T)  # (hw_in, HW)

    # Fold eval-mode BN scale into the conv weights; pad channel dims to 8.
    s1, b1 = _fold_bn(params["bn1_gamma"], params["bn1_beta"],
                      params["bn1_mean"], params["bn1_var"])
    s2, b2 = _fold_bn(params["bn2_gamma"], params["bn2_beta"],
                      params["bn2_mean"], params["bn2_var"])
    w1f = params["w1"] * s1[None, None, None, :]               # (3,3,Cin,Cmid)
    w2f = params["w2"] * s2[None, None, None, :]               # (3,3,Cmid,Cout)
    w1p = jnp.pad(w1f, ((0, 0), (0, 0), (0, 0), (0, Cmid_p - Cmid)))
    w2p = jnp.pad(w2f, ((0, 0), (0, 0), (0, Cmid_p - Cmid), (0, Cout_p - Cout)))
    # im2col row order in the kernel is (tap k)*C + c, matching reshape(9*C, .)
    w1_t = w1p.reshape(9 * Cin, Cmid_p).T.astype(jnp.float32)      # (Cmid_p, 9*Cin)
    w2_t = w2p.reshape(9 * Cmid_p, Cout_p).T.astype(jnp.float32)   # (Cout_p, 9*Cmid_p)
    b1_p = jnp.pad(b1, (0, Cmid_p - Cmid)).reshape(Cmid_p, 1).astype(jnp.float32)
    b2_p = jnp.pad(b2, (0, Cout_p - Cout)).reshape(Cout_p, 1).astype(jnp.float32)

    # Metadata-only reshapes of NCHW -> (N, C, H*W); no wrapper transposes.
    x2_f = x2_nchw.reshape(N, C2, HW)
    x1_f = x1_nchw.reshape(N, C1, hw_in)

    kernel = functools.partial(_up_double_conv_kernel, H=H, W=W)

    out_p = pl.pallas_call(
        kernel,
        out_shape=jax.ShapeDtypeStruct((N, Cout_p, HW), jnp.float32),
        grid_spec=pltpu.PrefetchScalarGridSpec(
            num_scalar_prefetch=0,
            grid=(N,),
            in_specs=[
                pl.BlockSpec((1, C2, HW), lambda n: (n, 0, 0)),
                pl.BlockSpec((1, C1, hw_in), lambda n: (n, 0, 0)),
                pl.BlockSpec((hw_in, HW), lambda n: (0, 0)),
                pl.BlockSpec((Cmid_p, 9 * Cin), lambda n: (0, 0)),
                pl.BlockSpec((Cmid_p, 1), lambda n: (0, 0)),
                pl.BlockSpec((Cout_p, 9 * Cmid_p), lambda n: (0, 0)),
                pl.BlockSpec((Cout_p, 1), lambda n: (0, 0)),
            ],
            out_specs=pl.BlockSpec((1, Cout_p, HW), lambda n: (n, 0, 0)),
        ),
        compiler_params=pltpu.CompilerParams(
            dimension_semantics=("parallel",)),   # batch shards across TCs (v7x)
    )(x2_f, x1_f, m_mat, w1_t, b1_p, w2_t, b2_p)

    # Strip channel padding (tiny copy) and restore NCHW spatial dims.
    return out_p[:, :Cout, :].reshape(N, Cout, H, W)


# ----------------------------------------------------------------------------
# Pure-JAX reference (lax conv) for correctness checking
# ----------------------------------------------------------------------------
def bilinear_upsample_x2_align_corners(x_nchw):
    """nn.Upsample(scale_factor=2, mode='bilinear', align_corners=True)."""
    N, C, H, W = x_nchw.shape
    out_h, out_w = 2 * H, 2 * W

    def axis_coords(in_size, out_size):
        if out_size == 1 or in_size == 1:
            src = jnp.zeros((out_size,), jnp.float32)
        else:
            src = jnp.arange(out_size, dtype=jnp.float32) * (
                (in_size - 1) / (out_size - 1))
        i0 = jnp.clip(jnp.floor(src).astype(jnp.int32), 0, in_size - 1)
        i1 = jnp.minimum(i0 + 1, in_size - 1)
        return i0, i1, src - i0.astype(jnp.float32)

    y0, y1, wy = axis_coords(H, out_h)
    x0, x1, wx = axis_coords(W, out_w)
    top = jnp.take(x_nchw, y0, axis=2)
    bot = jnp.take(x_nchw, y1, axis=2)
    v = top * (1.0 - wy)[None, None, :, None] + bot * wy[None, None, :, None]
    left = jnp.take(v, x0, axis=3)
    right = jnp.take(v, x1, axis=3)
    return left * (1.0 - wx) + right * wx


def _crop_for_negative_pad(x, pad_before, pad_after, axis):
    start = max(0, -pad_before)
    stop = x.shape[axis] - max(0, -pad_after)
    if start != 0 or stop != x.shape[axis]:
        x = lax.slice_in_dim(x, start, stop, axis=axis)
    return x, max(0, pad_before)


def _conv3x3_bn_relu_ref(x_nhwc, w_hwio, scale, bias):
    y = lax.conv_general_dilated(
        x_nhwc, w_hwio, window_strides=(1, 1), padding="SAME",
        dimension_numbers=("NHWC", "HWIO", "NHWC"))
    y = y * scale[None, None, None, :] + bias[None, None, None, :]
    return jnp.maximum(y, 0.0)


def up_forward_ref(params, x1_nchw, x2_nchw):
    H, W = x2_nchw.shape[2], x2_nchw.shape[3]
    x1u = bilinear_upsample_x2_align_corners(x1_nchw)
    diff_y, diff_x = H - x1u.shape[2], W - x1u.shape[3]
    pad_t, pad_b = diff_y // 2, diff_y - diff_y // 2
    pad_l, pad_r = diff_x // 2, diff_x - diff_x // 2
    x1u, off_y = _crop_for_negative_pad(x1u, pad_t, pad_b, axis=2)
    x1u, off_x = _crop_for_negative_pad(x1u, pad_l, pad_r, axis=3)
    x1u = jnp.pad(x1u, ((0, 0), (0, 0),
                        (off_y, H - off_y - x1u.shape[2]),
                        (off_x, W - off_x - x1u.shape[3])))
    x = jnp.concatenate([x2_nchw, x1u], axis=1)
    x_nhwc = jnp.transpose(x, (0, 2, 3, 1))
    s1, b1 = _fold_bn(params["bn1_gamma"], params["bn1_beta"],
                      params["bn1_mean"], params["bn1_var"])
    s2, b2 = _fold_bn(params["bn2_gamma"], params["bn2_beta"],
                      params["bn2_mean"], params["bn2_var"])
    h = _conv3x3_bn_relu_ref(x_nhwc, params["w1"], s1, b1)
    h = _conv3x3_bn_relu_ref(h, params["w2"], s2, b2)
    return jnp.transpose(h, (0, 3, 1, 2))


# ----------------------------------------------------------------------------
# Deterministic parameter init (shapes follow Up(in_channels=8, out_channels=4))
# ----------------------------------------------------------------------------
def init_params(key, in_channels, out_channels):
    mid = in_channels // 2
    ks = jax.random.split(key, 8)
    return {
        # conv weights stored HWIO (3,3,Cin,Cout)
        "w1": jax.random.normal(ks[0], (3, 3, in_channels, mid),
                                jnp.float32) * 0.1,
        "w2": jax.random.normal(ks[1], (3, 3, mid, out_channels),
                                jnp.float32) * 0.1,
        "bn1_gamma": 1.0 + 0.1 * jax.random.normal(ks[2], (mid,), jnp.float32),
        "bn1_beta": 0.05 * jax.random.normal(ks[3], (mid,), jnp.float32),
        "bn1_mean": 0.1 * jax.random.normal(ks[4], (mid,), jnp.float32),
        "bn1_var": 0.5 + jnp.abs(jax.random.normal(ks[5], (mid,),
                                                   jnp.float32)) * 0.5,
        "bn2_gamma": 1.0 + 0.1 * jax.random.normal(ks[6], (out_channels,),
                                                   jnp.float32),
        "bn2_beta": 0.05 * jax.random.normal(ks[7], (out_channels,),
                                             jnp.float32),
        "bn2_mean": jnp.zeros((out_channels,), jnp.float32),
        "bn2_var": jnp.ones((out_channels,), jnp.float32),
    }


if __name__ == "__main__":
    in_channels, out_channels = 8, 4      # Up(8, 4): mid = 4
    N = 2
    key = jax.random.PRNGKey(0)
    k1, k2, kp = jax.random.split(key, 3)

    # x1: coarse features (in_channels//2 chans, 7x7 -> upsample 14x14 ->
    # pad to x2's 16x16, exercising the F.pad path); x2: skip connection.
    x1 = jax.random.normal(k1, (N, in_channels // 2, 7, 7), jnp.float32)
    x2 = jax.random.normal(k2, (N, in_channels // 2, 16, 16), jnp.float32)

    params = init_params(kp, in_channels, out_channels)

    out = jax.jit(up_forward)(params, x1, x2)
    out = jax.block_until_ready(out)

    ref = jax.block_until_ready(up_forward_ref(params, x1, x2))
    assert out.shape == (N, out_channels, 16, 16), out.shape
    np.testing.assert_allclose(np.asarray(out), np.asarray(ref),
                               rtol=1e-4, atol=1e-4)

    print("KERNEL_OK")
</pallas_src>

<mosaic_0001>
module attributes {stable_mosaic.version = 11 : i64} {
  func.func @_up_double_conv_kernel(%arg0: i32, %arg1: memref<1x4x256xf32, #tpu.memory_space<vmem>>, %arg2: memref<1x4x49xf32, #tpu.memory_space<vmem>>, %arg3: memref<49x256xf32, #tpu.memory_space<vmem>>, %arg4: memref<8x72xf32, #tpu.memory_space<vmem>>, %arg5: memref<8x1xf32, #tpu.memory_space<vmem>>, %arg6: memref<8x72xf32, #tpu.memory_space<vmem>>, %arg7: memref<8x1xf32, #tpu.memory_space<vmem>>, %arg8: memref<1x8x256xf32, #tpu.memory_space<vmem>>) attributes {dimension_semantics = [#tpu.dimension_semantics<parallel>], iteration_bounds = array<i64: 2>, scalar_prefetch = 0 : i64, scratch_operands = 0 : i64, tpu.core_type = #tpu.core_type<tc>, window_params = [{transform_indices = @transform_0, window_bounds = array<i64: 1, 4, 256>}, {transform_indices = @transform_1, window_bounds = array<i64: 1, 4, 49>}, {pipeline_mode = #tpu.pipeline_mode<synchronous>, transform_indices = @transform_2, window_bounds = array<i64: 49, 256>}, {pipeline_mode = #tpu.pipeline_mode<synchronous>, transform_indices = @transform_3, window_bounds = array<i64: 8, 72>}, {pipeline_mode = #tpu.pipeline_mode<synchronous>, transform_indices = @transform_4, window_bounds = array<i64: 8, 1>}, {pipeline_mode = #tpu.pipeline_mode<synchronous>, transform_indices = @transform_5, window_bounds = array<i64: 8, 72>}, {pipeline_mode = #tpu.pipeline_mode<synchronous>, transform_indices = @transform_6, window_bounds = array<i64: 8, 1>}, {transform_indices = @transform_7, window_bounds = array<i64: 1, 8, 256>}]} {
    %c0 = arith.constant 0 : index
    %c0_0 = arith.constant 0 : index
    %c0_1 = arith.constant 0 : index
    %0 = vector.load %arg2[%c0, %c0_0, %c0_1] : memref<1x4x49xf32, #tpu.memory_space<vmem>>, vector<1x4x49xf32>
    %1 = vector.shape_cast %0 : vector<1x4x49xf32> to vector<4x49xf32>
    %c0_2 = arith.constant 0 : index
    %c0_3 = arith.constant 0 : index
    %2 = vector.load %arg3[%c0_2, %c0_3] : memref<49x256xf32, #tpu.memory_space<vmem>>, vector<49x256xf32>
    %cst = arith.constant dense<0.000000e+00> : vector<4x256xf32>
    %3 = tpu.matmul %1, %2, %cst {dimension_numbers = #tpu.dot_dimension_numbers<[1], [0], [0], [1], [0, 0, 1, 1], [], []>} : vector<4x49xf32>, vector<49x256xf32>, vector<4x256xf32> -> vector<4x256xf32>
    %c0_4 = arith.constant 0 : index
    %c0_5 = arith.constant 0 : index
    %c0_6 = arith.constant 0 : index
    %4 = vector.load %arg1[%c0_4, %c0_5, %c0_6] : memref<1x4x256xf32, #tpu.memory_space<vmem>>, vector<1x4x256xf32>
    %5 = vector.shape_cast %4 : vector<1x4x256xf32> to vector<4x256xf32>
    %6 = tpu.concatenate %5, %3 in 0 : vector<4x256xf32>, vector<4x256xf32> -> vector<8x256xf32>
    %7 = tpu.iota {dimensions = array<i32: 1>} : vector<1x256xi32>
    %c16_i32 = arith.constant 16 : i32
    %c0_i32 = arith.constant 0 : i32
    %8 = arith.cmpi eq, %c16_i32, %c0_i32 : i32
    %c1_i32 = arith.constant 1 : i32
    %9 = arith.select %8, %c1_i32, %c16_i32 : i32
    %10 = vector.broadcast %9 : i32 to vector<1x256xi32>
    %11 = arith.remsi %7, %10 : vector<1x256xi32>
    %c0_i32_7 = arith.constant 0 : i32
    %12 = vector.broadcast %c0_i32_7 : i32 to vector<1x256xi32>
    %13 = arith.cmpi ne, %11, %12 : vector<1x256xi32>
    %c0_i32_8 = arith.constant 0 : i32
    %14 = vector.broadcast %c0_i32_8 : i32 to vector<1x256xi32>
    %15 = arith.cmpi slt, %11, %14 : vector<1x256xi32>
    %c0_i32_9 = arith.constant 0 : i32
    %16 = arith.cmpi slt, %9, %c0_i32_9 : i32
    %17 = vector.broadcast %16 : i1 to vector<1x256xi1>
    %18 = vector.broadcast %17 : vector<1x256xi1> to vector<1x256xi1>
    %19 = arith.xori %15, %18 : vector<1x256xi1>
    %20 = arith.andi %19, %13 : vector<1x256xi1>
    %21 = vector.broadcast %9 : i32 to vector<1x256xi32>
    %22 = arith.addi %11, %21 : vector<1x256xi32>
    %23 = arith.select %20, %22, %11 : vector<1x256xi1>, vector<1x256xi32>
    %c16_i32_10 = arith.constant 16 : i32
    %24 = vector.broadcast %c16_i32_10 : i32 to vector<1x256xi32>
    %25 = arith.cmpi sge, %7, %24 : vector<1x256xi32>
    %c1_i32_11 = arith.constant 1 : i32
    %26 = vector.broadcast %c1_i32_11 : i32 to vector<1x256xi32>
    %27 = arith.cmpi sge, %23, %26 : vector<1x256xi32>
    %28 = arith.andi %25, %27 : vector<1x256xi1>
    %29 = arith.extui %28 : vector<1x256xi1> to vector<1x256xi32>
    %30 = arith.sitofp %29 : vector<1x256xi32> to vector<1x256xf32>
    %c16_i32_12 = arith.constant 16 : i32
    %31 = vector.broadcast %c16_i32_12 : i32 to vector<1x256xi32>
    %32 = arith.cmpi sge, %7, %31 : vector<1x256xi32>
    %33 = arith.extui %32 : vector<1x256xi1> to vector<1x256xi32>
    %34 = arith.sitofp %33 : vector<1x256xi32> to vector<1x256xf32>
    %c16_i32_13 = arith.constant 16 : i32
    %35 = vector.broadcast %c16_i32_13 : i32 to vector<1x256xi32>
    %36 = arith.cmpi sge, %7, %35 : vector<1x256xi32>
    %c14_i32 = arith.constant 14 : i32
    %37 = vector.broadcast %c14_i32 : i32 to vector<1x256xi32>
    %38 = arith.cmpi sle, %23, %37 : vector<1x256xi32>
    %39 = arith.andi %36, %38 : vector<1x256xi1>
    %40 = arith.extui %39 : vector<1x256xi1> to vector<1x256xi32>
    %41 = arith.sitofp %40 : vector<1x256xi32> to vector<1x256xf32>
    %c1_i32_14 = arith.constant 1 : i32
    %42 = vector.broadcast %c1_i32_14 : i32 to vector<1x256xi32>
    %43 = arith.cmpi sge, %23, %42 : vector<1x256xi32>
    %44 = arith.extui %43 : vector<1x256xi1> to vector<1x256xi32>
    %45 = arith.sitofp %44 : vector<1x256xi32> to vector<1x256xf32>
    %c14_i32_15 = arith.constant 14 : i32
    %46 = vector.broadcast %c14_i32_15 : i32 to vector<1x256xi32>
    %47 = arith.cmpi sle, %23, %46 : vector<1x256xi32>
    %48 = arith.extui %47 : vector<1x256xi1> to vector<1x256xi32>
    %49 = arith.sitofp %48 : vector<1x256xi32> to vector<1x256xf32>
    %c240_i32 = arith.constant 240 : i32
    %50 = vector.broadcast %c240_i32 : i32 to vector<1x256xi32>
    %51 = arith.cmpi slt, %7, %50 : vector<1x256xi32>
    %c1_i32_16 = arith.constant 1 : i32
    %52 = vector.broadcast %c1_i32_16 : i32 to vector<1x256xi32>
    %53 = arith.cmpi sge, %23, %52 : vector<1x256xi32>
    %54 = arith.andi %51, %53 : vector<1x256xi1>
    %55 = arith.extui %54 : vector<1x256xi1> to vector<1x256xi32>
    %56 = arith.sitofp %55 : vector<1x256xi32> to vector<1x256xf32>
    %c240_i32_17 = arith.constant 240 : i32
    %57 = vector.broadcast %c240_i32_17 : i32 to vector<1x256xi32>
    %58 = arith.cmpi slt, %7, %57 : vector<1x256xi32>
    %59 = arith.extui %58 : vector<1x256xi1> to vector<1x256xi32>
    %60 = arith.sitofp %59 : vector<1x256xi32> to vector<1x256xf32>
    %c240_i32_18 = arith.constant 240 : i32
    %61 = vector.broadcast %c240_i32_18 : i32 to vector<1x256xi32>
    %62 = arith.cmpi slt, %7, %61 : vector<1x256xi32>
    %c14_i32_19 = arith.constant 14 : i32
    %63 = vector.broadcast %c14_i32_19 : i32 to vector<1x256xi32>
    %64 = arith.cmpi sle, %23, %63 : vector<1x256xi32>
    %65 = arith.andi %62, %64 : vector<1x256xi1>
    %66 = arith.extui %65 : vector<1x256xi1> to vector<1x256xi32>
    %67 = arith.sitofp %66 : vector<1x256xi32> to vector<1x256xf32>
    %c0_20 = arith.constant 0 : index
    %c0_21 = arith.constant 0 : index
    %68 = vector.load %arg4[%c0_20, %c0_21] : memref<8x72xf32, #tpu.memory_space<vmem>>, vector<8x72xf32>
    %c17_i32 = arith.constant 17 : i32
    %69 = tpu.dynamic_rotate %6 by %c17_i32 dim 1 : vector<8x256xf32>, i32 -> vector<8x256xf32>
    %70 = vector.broadcast %30 : vector<1x256xf32> to vector<8x256xf32>
    %71 = arith.mulf %69, %70 : vector<8x256xf32>
    %c16_i32_22 = arith.constant 16 : i32
    %72 = tpu.dynamic_rotate %6 by %c16_i32_22 dim 1 : vector<8x256xf32>, i32 -> vector<8x256xf32>
    %73 = vector.broadcast %34 : vector<1x256xf32> to vector<8x256xf32>
    %74 = arith.mulf %72, %73 : vector<8x256xf32>
    %c15_i32 = arith.constant 15 : i32
    %75 = tpu.dynamic_rotate %6 by %c15_i32 dim 1 : vector<8x256xf32>, i32 -> vector<8x256xf32>
    %76 = vector.broadcast %41 : vector<1x256xf32> to vector<8x256xf32>
    %77 = arith.mulf %75, %76 : vector<8x256xf32>
    %c1_i32_23 = arith.constant 1 : i32
    %78 = tpu.dynamic_rotate %6 by %c1_i32_23 dim 1 : vector<8x256xf32>, i32 -> vector<8x256xf32>
    %79 = vector.broadcast %45 : vector<1x256xf32> to vector<8x256xf32>
    %80 = arith.mulf %78, %79 : vector<8x256xf32>
    %c255_i32 = arith.constant 255 : i32
    %81 = tpu.dynamic_rotate %6 by %c255_i32 dim 1 : vector<8x256xf32>, i32 -> vector<8x256xf32>
    %82 = vector.broadcast %49 : vector<1x256xf32> to vector<8x256xf32>
    %83 = arith.mulf %81, %82 : vector<8x256xf32>
    %c241_i32 = arith.constant 241 : i32
    %84 = tpu.dynamic_rotate %6 by %c241_i32 dim 1 : vector<8x256xf32>, i32 -> vector<8x256xf32>
    %85 = vector.broadcast %56 : vector<1x256xf32> to vector<8x256xf32>
    %86 = arith.mulf %84, %85 : vector<8x256xf32>
    %c240_i32_24 = arith.constant 240 : i32
    %87 = tpu.dynamic_rotate %6 by %c240_i32_24 dim 1 : vector<8x256xf32>, i32 -> vector<8x256xf32>
    %88 = vector.broadcast %60 : vector<1x256xf32> to vector<8x256xf32>
    %89 = arith.mulf %87, %88 : vector<8x256xf32>
    %c239_i32 = arith.constant 239 : i32
    %90 = tpu.dynamic_rotate %6 by %c239_i32 dim 1 : vector<8x256xf32>, i32 -> vector<8x256xf32>
    %91 = vector.broadcast %67 : vector<1x256xf32> to vector<8x256xf32>
    %92 = arith.mulf %90, %91 : vector<8x256xf32>
    %93 = tpu.concatenate %71, %74, %77, %80, %6, %83, %86, %89, %92 in 0 : vector<8x256xf32>, vector<8x256xf32>, vector<8x256xf32>, vector<8x256xf32>, vector<8x256xf32>, vector<8x256xf32>, vector<8x256xf32>, vector<8x256xf32>, vector<8x256xf32> -> vector<72x256xf32>
    %cst_25 = arith.constant dense<0.000000e+00> : vector<8x256xf32>
    %94 = tpu.matmul %68, %93, %cst_25 {dimension_numbers = #tpu.dot_dimension_numbers<[1], [0], [0], [1], [0, 0, 1, 1], [], []>} : vector<8x72xf32>, vector<72x256xf32>, vector<8x256xf32> -> vector<8x256xf32>
    %c0_26 = arith.constant 0 : index
    %c0_27 = arith.constant 0 : index
    %95 = vector.load %arg5[%c0_26, %c0_27] : memref<8x1xf32, #tpu.memory_space<vmem>>, vector<8x1xf32>
    %96 = vector.broadcast %95 : vector<8x1xf32> to vector<8x256xf32>
    %97 = arith.addf %94, %96 : vector<8x256xf32>
    %cst_28 = arith.constant 0.000000e+00 : f32
    %98 = vector.broadcast %cst_28 : f32 to vector<8x256xf32>
    %99 = arith.maximumf %97, %98 : vector<8x256xf32>
    %c0_29 = arith.constant 0 : index
    %c0_30 = arith.constant 0 : index
    %100 = vector.load %arg6[%c0_29, %c0_30] : memref<8x72xf32, #tpu.memory_space<vmem>>, vector<8x72xf32>
    %c17_i32_31 = arith.constant 17 : i32
    %101 = tpu.dynamic_rotate %99 by %c17_i32_31 dim 1 : vector<8x256xf32>, i32 -> vector<8x256xf32>
    %102 = vector.broadcast %30 : vector<1x256xf32> to vector<8x256xf32>
    %103 = arith.mulf %101, %102 : vector<8x256xf32>
    %c16_i32_32 = arith.constant 16 : i32
    %104 = tpu.dynamic_rotate %99 by %c16_i32_32 dim 1 : vector<8x256xf32>, i32 -> vector<8x256xf32>
    %105 = vector.broadcast %34 : vector<1x256xf32> to vector<8x256xf32>
    %106 = arith.mulf %104, %105 : vector<8x256xf32>
    %c15_i32_33 = arith.constant 15 : i32
    %107 = tpu.dynamic_rotate %99 by %c15_i32_33 dim 1 : vector<8x256xf32>, i32 -> vector<8x256xf32>
    %108 = vector.broadcast %41 : vector<1x256xf32> to vector<8x256xf32>
    %109 = arith.mulf %107, %108 : vector<8x256xf32>
    %c1_i32_34 = arith.constant 1 : i32
    %110 = tpu.dynamic_rotate %99 by %c1_i32_34 dim 1 : vector<8x256xf32>, i32 -> vector<8x256xf32>
    %111 = vector.broadcast %45 : vector<1x256xf32> to vector<8x256xf32>
    %112 = arith.mulf %110, %111 : vector<8x256xf32>
    %c255_i32_35 = arith.constant 255 : i32
    %113 = tpu.dynamic_rotate %99 by %c255_i32_35 dim 1 : vector<8x256xf32>, i32 -> vector<8x256xf32>
    %114 = vector.broadcast %49 : vector<1x256xf32> to vector<8x256xf32>
    %115 = arith.mulf %113, %114 : vector<8x256xf32>
    %c241_i32_36 = arith.constant 241 : i32
    %116 = tpu.dynamic_rotate %99 by %c241_i32_36 dim 1 : vector<8x256xf32>, i32 -> vector<8x256xf32>
    %117 = vector.broadcast %56 : vector<1x256xf32> to vector<8x256xf32>
    %118 = arith.mulf %116, %117 : vector<8x256xf32>
    %c240_i32_37 = arith.constant 240 : i32
    %119 = tpu.dynamic_rotate %99 by %c240_i32_37 dim 1 : vector<8x256xf32>, i32 -> vector<8x256xf32>
    %120 = vector.broadcast %60 : vector<1x256xf32> to vector<8x256xf32>
    %121 = arith.mulf %119, %120 : vector<8x256xf32>
    %c239_i32_38 = arith.constant 239 : i32
    %122 = tpu.dynamic_rotate %99 by %c239_i32_38 dim 1 : vector<8x256xf32>, i32 -> vector<8x256xf32>
    %123 = vector.broadcast %67 : vector<1x256xf32> to vector<8x256xf32>
    %124 = arith.mulf %122, %123 : vector<8x256xf32>
    %125 = tpu.concatenate %103, %106, %109, %112, %99, %115, %118, %121, %124 in 0 : vector<8x256xf32>, vector<8x256xf32>, vector<8x256xf32>, vector<8x256xf32>, vector<8x256xf32>, vector<8x256xf32>, vector<8x256xf32>, vector<8x256xf32>, vector<8x256xf32> -> vector<72x256xf32>
    %cst_39 = arith.constant dense<0.000000e+00> : vector<8x256xf32>
    %126 = tpu.matmul %100, %125, %cst_39 {dimension_numbers = #tpu.dot_dimension_numbers<[1], [0], [0], [1], [0, 0, 1, 1], [], []>} : vector<8x72xf32>, vector<72x256xf32>, vector<8x256xf32> -> vector<8x256xf32>
    %c0_40 = arith.constant 0 : index
    %c0_41 = arith.constant 0 : index
    %127 = vector.load %arg7[%c0_40, %c0_41] : memref<8x1xf32, #tpu.memory_space<vmem>>, vector<8x1xf32>
    %128 = vector.broadcast %127 : vector<8x1xf32> to vector<8x256xf32>
    %129 = arith.addf %126, %128 : vector<8x256xf32>
    %cst_42 = arith.constant 0.000000e+00 : f32
    %130 = vector.broadcast %cst_42 : f32 to vector<8x256xf32>
    %131 = arith.maximumf %129, %130 : vector<8x256xf32>
    %c0_43 = arith.constant 0 : index
    %c0_44 = arith.constant 0 : index
    %c0_45 = arith.constant 0 : index
    %132 = vector.load %arg8[%c0_43, %c0_44, %c0_45] : memref<1x8x256xf32, #tpu.memory_space<vmem>>, vector<1x8x256xf32>
    %133 = vector.shape_cast %132 : vector<1x8x256xf32> to vector<8x256xf32>
    %134 = vector.shape_cast %131 : vector<8x256xf32> to vector<1x8x256xf32>
    tpu.vector_store %arg8[%c0_43, %c0_44, %c0_45], %134 {strides = array<i32>} : memref<1x8x256xf32, #tpu.memory_space<vmem>>, vector<1x8x256xf32>,
    return
  }
  func.func @transform_0(%arg0: i32) -> (i32, i32, i32) {
    %c0_i32 = arith.constant 0 : i32
    %c0_i32_0 = arith.constant 0 : i32
    %c0_i32_1 = arith.constant 0 : i32
    return %arg0, %c0_i32, %c0_i32_0 : i32, i32, i32
  }
  func.func @transform_1(%arg0: i32) -> (i32, i32, i32) {
    %c0_i32 = arith.constant 0 : i32
    %c0_i32_0 = arith.constant 0 : i32
    %c0_i32_1 = arith.constant 0 : i32
    return %arg0, %c0_i32, %c0_i32_0 : i32, i32, i32
  }
  func.func @transform_2(%arg0: i32) -> (i32, i32) {
    %c0_i32 = arith.constant 0 : i32
    %c0_i32_0 = arith.constant 0 : i32
    %c0_i32_1 = arith.constant 0 : i32
    return %c0_i32, %c0_i32_0 : i32, i32
  }
  func.func @transform_3(%arg0: i32) -> (i32, i32) {
    %c0_i32 = arith.constant 0 : i32
    %c0_i32_0 = arith.constant 0 : i32
    %c0_i32_1 = arith.constant 0 : i32
    return %c0_i32, %c0_i32_0 : i32, i32
  }
  func.func @transform_4(%arg0: i32) -> (i32, i32) {
    %c0_i32 = arith.constant 0 : i32
    %c0_i32_0 = arith.constant 0 : i32
    %c0_i32_1 = arith.constant 0 : i32
    return %c0_i32, %c0_i32_0 : i32, i32
  }
  func.func @transform_5(%arg0: i32) -> (i32, i32) {
    %c0_i32 = arith.constant 0 : i32
    %c0_i32_0 = arith.constant 0 : i32
    %c0_i32_1 = arith.constant 0 : i32
    return %c0_i32, %c0_i32_0 : i32, i32
  }
  func.func @transform_6(%arg0: i32) -> (i32, i32) {
    %c0_i32 = arith.constant 0 : i32
    %c0_i32_0 = arith.constant 0 : i32
    %c0_i32_1 = arith.constant 0 : i32
    return %c0_i32, %c0_i32_0 : i32, i32
  }
  func.func @transform_7(%arg0: i32) -> (i32, i32, i32) {
    %c0_i32 = arith.constant 0 : i32
    %c0_i32_0 = arith.constant 0 : i32
    %c0_i32_1 = arith.constant 0 : i32
    return %arg0, %c0_i32, %c0_i32_0 : i32, i32, i32
  }
}

</mosaic_0001>

<llo_original>
// kernel: up_forward.1
$region0: #{up_forward.1}
  #allocation0 [shape = 'u32[]', space=smem, size = 0x4, offset = 0x4, fixed_abs, tag = 'smem constant byte address 0x4 - core index']
  #allocation1 [shape = 'u32[144,128]{1,0:T(1,128)}', space=vmem, size = 0x12000, scoped, tag = 'internal scratch']
  %s0 = inlined_call_operand.vmem [shape: f32[2,4,256], index: 0, kind: input, shape index: {}]
  %s1 = inlined_call_operand.vmem [shape: f32[2,4,49], index: 1, kind: input, shape index: {}]
  %s2 = inlined_call_operand.vmem [shape: f32[49,256], index: 2, kind: input, shape index: {}]
  %s3 = inlined_call_operand.vmem [shape: f32[8,72], index: 3, kind: input, shape index: {}]
  %s4 = inlined_call_operand.vmem [shape: f32[8,1], index: 4, kind: input, shape index: {}]
  %s5 = inlined_call_operand.vmem [shape: f32[8,72], index: 5, kind: input, shape index: {}]
  %s6 = inlined_call_operand.vmem [shape: f32[8,1], index: 6, kind: input, shape index: {}]
  %s7 = inlined_call_operand.vmem [shape: f32[2,8,256], index: 7, kind: output, shape index: {}]
  %s8 = sld [smem:[#allocation0]]
  $region61: #{up_forward.1} parent=0
    _
  %s10 = ssub.s32 1, %s8
  %s11 = scalar_select 0, %s10, %s8
  loop: start=0, step=1, limit=4
  $region2: #{up_forward.1} parent=0 // loop_pre_header
    _
  $region3: #{up_forward.1} parent=0 // loop_header
    %s13 = sphi 0, %s17
    %p14 = scmp.ge.s32.totalorder %s13, 4
    %s23 = sphi 0, %s25
    %s26 = sphi 0, %s23
    %s27 = sphi 0, %s26
    %s43 = sphi 0, %s27
    %s49 = sphi 0, %s51
    %s52 = sphi 0, %s49
    %s53 = sphi 0, %s52
    %s69 = sphi 0, %s53
    %s73 = sphi 0, %s73
    %s75 = sphi 0, %s73
    %s76 = sphi 0, %s75
    %s90 = sphi 0, %s76
    %s94 = sphi 0, %s94
    %s96 = sphi 0, %s94
    %s97 = sphi 0, %s96
    %s111 = sphi 0, %s97
    %s115 = sphi 0, %s115
    %s117 = sphi 0, %s115
    %s118 = sphi 0, %s117
    %s132 = sphi 0, %s118
    %s136 = sphi 0, %s136
    %s138 = sphi 0, %s136
    %s139 = sphi 0, %s138
    %s153 = sphi 0, %s139
    %s157 = sphi 0, %s157
    %s159 = sphi 0, %s157
    %s160 = sphi 0, %s159
    %s174 = sphi 0, %s160
    %s180 = sphi 0, %s182
    %s183 = sphi 0, %s180
    %s184 = sphi 0, %s183
    %s200 = sphi 0, %s184
  $region4: #{up_forward.1} parent=0 // loop_header_branch
    %16 = sbr.rel (%p14) target = $region8
  $region5: #{up_forward.1} parent=0 // loop_body
    %s18 = ssub.s32 %s13, 1
    %s19 = ssub.s32 %s13, 2
    %s20 = sadd.s32 %s13, 1
    %s21 = ssub.s32 %s13, %s20
    %p22 = scmp.eq.s32.totalorder %s21, 0
    %s24 = sadd.s32 %s23, 1
    %s25 = scalar_select %p22, %s23, %s24
    %p28 = pneg %p22
    %p29 = scmp.eq.s32.totalorder %s13, 1
    %p30 = por %p28, %p29
    %p31 = scmp.ne.s32.totalorder %s23, %s26
    %p32 = scmp.eq.s32.totalorder %s13, 0
    %p33 = por %p31, %p32
    %p34 = scmp.ne.s32.totalorder %s23, %s26
    %p35 = scmp.eq.s32.totalorder %s18, 1
    %p36 = por %p34, %p35
    %p37 = scmp.ne.s32.totalorder %s26, %s27
    %p38 = scmp.eq.s32.totalorder %s18, 0
    %p39 = por %p37, %p38
    %p40 = scmp.ne.s32.totalorder %s26, %s27
    %p41 = scmp.eq.s32.totalorder %s19, 1
    %p42 = por %p40, %p41
    %p44 = scmp.ne.s32.totalorder %s27, %s43
    %p45 = scmp.eq.s32.totalorder %s19, 0
    %p46 = por %p44, %p45
    %s47 = ssub.s32 %s13, %s20
    %p48 = scmp.eq.s32.totalorder %s47, 0
    %s50 = sadd.s32 %s49, 1
    %s51 = scalar_select %p48, %s49, %s50
    %p54 = pneg %p48
    %p55 = scmp.eq.s32.totalorder %s13, 1
    %p56 = por %p54, %p55
    %p57 = scmp.ne.s32.totalorder %s49, %s52
    %p58 = scmp.eq.s32.totalorder %s13, 0
    %p59 = por %p57, %p58
    %p60 = scmp.ne.s32.totalorder %s49, %s52
    %p61 = scmp.eq.s32.totalorder %s18, 1
    %p62 = por %p60, %p61
    %p63 = scmp.ne.s32.totalorder %s52, %s53
    %p64 = scmp.eq.s32.totalorder %s18, 0
    %p65 = por %p63, %p64
    %p66 = scmp.ne.s32.totalorder %s52, %s53
    %p67 = scmp.eq.s32.totalorder %s19, 1
    %p68 = por %p66, %p67
    %p70 = scmp.ne.s32.totalorder %s53, %s69
    %p71 = scmp.eq.s32.totalorder %s19, 0
    %p72 = por %p70, %p71
    %s74 = sadd.s32 %s73, 1
    %p77 = scmp.eq.s32.totalorder %s13, 1
    %p78 = scmp.ne.s32.totalorder %s73, %s75
    %p79 = scmp.eq.s32.totalorder %s13, 0
    %p80 = por %p78, %p79
    %p81 = scmp.ne.s32.totalorder %s73, %s75
    %p82 = scmp.eq.s32.totalorder %s18, 1
    %p83 = por %p81, %p82
    %p84 = scmp.ne.s32.totalorder %s75, %s76
    %p85 = scmp.eq.s32.totalorder %s18, 0
    %p86 = por %p84, %p85
    %p87 = scmp.ne.s32.totalorder %s75, %s76
    %p88 = scmp.eq.s32.totalorder %s19, 1
    %p89 = por %p87, %p88
    %p91 = scmp.ne.s32.totalorder %s76, %s90
    %p92 = scmp.eq.s32.totalorder %s19, 0
    %p93 = por %p91, %p92
    %s95 = sadd.s32 %s94, 1
    %p98 = scmp.eq.s32.totalorder %s13, 1
    %p99 = scmp.ne.s32.totalorder %s94, %s96
    %p100 = scmp.eq.s32.totalorder %s13, 0
    %p101 = por %p99, %p100
    %p102 = scmp.ne.s32.totalorder %s94, %s96
    %p103 = scmp.eq.s32.totalorder %s18, 1
    %p104 = por %p102, %p103
    %p105 = scmp.ne.s32.totalorder %s96, %s97
    %p106 = scmp.eq.s32.totalorder %s18, 0
    %p107 = por %p105, %p106
    %p108 = scmp.ne.s32.totalorder %s96, %s97
    %p109 = scmp.eq.s32.totalorder %s19, 1
    %p110 = por %p108, %p109
    %p112 = scmp.ne.s32.totalorder %s97, %s111
    %p113 = scmp.eq.s32.totalorder %s19, 0
    %p114 = por %p112, %p113
    %s116 = sadd.s32 %s115, 1
    %p119 = scmp.eq.s32.totalorder %s13, 1
    %p120 = scmp.ne.s32.totalorder %s115, %s117
    %p121 = scmp.eq.s32.totalorder %s13, 0
    %p122 = por %p120, %p121
    %p123 = scmp.ne.s32.totalorder %s115, %s117
    %p124 = scmp.eq.s32.totalorder %s18, 1
    %p125 = por %p123, %p124
    %p126 = scmp.ne.s32.totalorder %s117, %s118
    %p127 = scmp.eq.s32.totalorder %s18, 0
    %p128 = por %p126, %p127
    %p129 = scmp.ne.s32.totalorder %s117, %s118
    %p130 = scmp.eq.s32.totalorder %s19, 1
    %p131 = por %p129, %p130
    %p133 = scmp.ne.s32.totalorder %s118, %s132
    %p134 = scmp.eq.s32.totalorder %s19, 0
    %p135 = por %p133, %p134
    %s137 = sadd.s32 %s136, 1
    %p140 = scmp.eq.s32.totalorder %s13, 1
    %p141 = scmp.ne.s32.totalorder %s136, %s138
    %p142 = scmp.eq.s32.totalorder %s13, 0
    %p143 = por %p141, %p142
    %p144 = scmp.ne.s32.totalorder %s136, %s138
    %p145 = scmp.eq.s32.totalorder %s18, 1
    %p146 = por %p144, %p145
    %p147 = scmp.ne.s32.totalorder %s138, %s139
    %p148 = scmp.eq.s32.totalorder %s18, 0
    %p149 = por %p147, %p148
    %p150 = scmp.ne.s32.totalorder %s138, %s139
    %p151 = scmp.eq.s32.totalorder %s19, 1
    %p152 = por %p150, %p151
    %p154 = scmp.ne.s32.totalorder %s139, %s153
    %p155 = scmp.eq.s32.totalorder %s19, 0
    %p156 = por %p154, %p155
    %s158 = sadd.s32 %s157, 1
    %p161 = scmp.eq.s32.totalorder %s13, 1
    %p162 = scmp.ne.s32.totalorder %s157, %s159
    %p163 = scmp.eq.s32.totalorder %s13, 0
    %p164 = por %p162, %p163
    %p165 = scmp.ne.s32.totalorder %s157, %s159
    %p166 = scmp.eq.s32.totalorder %s18, 1
    %p167 = por %p165, %p166
    %p168 = scmp.ne.s32.totalorder %s159, %s160
    %p169 = scmp.eq.s32.totalorder %s18, 0
    %p170 = por %p168, %p169
    %p171 = scmp.ne.s32.totalorder %s159, %s160
    %p172 = scmp.eq.s32.totalorder %s19, 1
    %p173 = por %p171, %p172
    %p175 = scmp.ne.s32.totalorder %s160, %s174
    %p176 = scmp.eq.s32.totalorder %s19, 0
    %p177 = por %p175, %p176
    %s178 = ssub.s32 %s13, %s20
    %p179 = scmp.eq.s32.totalorder %s178, 0
    %s181 = sadd.s32 %s180, 1
    %s182 = scalar_select %p179, %s180, %s181
    %p185 = pneg %p179
    %p186 = scmp.eq.s32.totalorder %s13, 1
    %p187 = por %p185, %p186
    %p188 = scmp.ne.s32.totalorder %s180, %s183
    %p189 = scmp.eq.s32.totalorder %s13, 0
    %p190 = por %p188, %p189
    %p191 = scmp.ne.s32.totalorder %s180, %s183
    %p192 = scmp.eq.s32.totalorder %s18, 1
    %p193 = por %p191, %p192
    %p194 = scmp.ne.s32.totalorder %s183, %s184
    %p195 = scmp.eq.s32.totalorder %s18, 0
    %p196 = por %p194, %p195
    %p197 = scmp.ne.s32.totalorder %s183, %s184
    %p198 = scmp.eq.s32.totalorder %s19, 1
    %p199 = por %p197, %p198
    %p201 = scmp.ne.s32.totalorder %s184, %s200
    %p202 = scmp.eq.s32.totalorder %s19, 0
    %p203 = por %p201, %p202
    %p204 = scmp.le.s32.totalorder 1, %s13
    %p205 = scmp.lt.s32.totalorder %s13, 3
    %p206 = pnand %p204, %p205
    %p207 = pneg %p206
    // Predicated region
    $region9: #{up_forward.1} parent=5 // pred_check
      _
    $region10: #{up_forward.1} parent=5 // pred_check_branch
      %209 = sbr.rel (%p206) target = $region12
    $region11: #{up_forward.1} parent=5 // pred_region
      %s210 = ssub.s32 %s13, 1
      // Predicated region
      $region13: #{up_forward.1} parent=11 // pred_check
        %p211 = pneg %p86
      $region14: #{up_forward.1} parent=11 // pred_check_branch
        %213 = sbr.rel (%p211) target = $region16
      $region15: #{up_forward.1} parent=11 // pred_region
        _
      $region16: #{up_forward.1} parent=11 // pred_fallthru
        _
      // Predicated region
      $region17: #{up_forward.1} parent=11 // pred_check
        %p214 = pneg %p107
      $region18: #{up_forward.1} parent=11 // pred_check_branch
        %216 = sbr.rel (%p214) target = $region20
      $region19: #{up_forward.1} parent=11 // pred_region
        _
      $region20: #{up_forward.1} parent=11 // pred_fallthru
        _
      // Predicated region
      $region21: #{up_forward.1} parent=11 // pred_check
        %p217 = pneg %p128
      $region22: #{up_forward.1} parent=11 // pred_check_branch
        %219 = sbr.rel (%p217) target = $region24
      $region23: #{up_forward.1} parent=11 // pred_region
        _
      $region24: #{up_forward.1} parent=11 // pred_fallthru
        _
      // Predicated region
      $region25: #{up_forward.1} parent=11 // pred_check
        %p220 = pneg %p149
      $region26: #{up_forward.1} parent=11 // pred_check_branch
        %222 = sbr.rel (%p220) target = $region28
      $region27: #{up_forward.1} parent=11 // pred_region
        _
      $region28: #{up_forward.1} parent=11 // pred_fallthru
        _
      // Predicated region
      $region29: #{up_forward.1} parent=11 // pred_check
        %p223 = pneg %p170
      $region30: #{up_forward.1} parent=11 // pred_check_branch
        %225 = sbr.rel (%p223) target = $region32
      $region31: #{up_forward.1} parent=11 // pred_region
        _
      $region32: #{up_forward.1} parent=11 // pred_fallthru
        _
    $region12: #{up_forward.1} parent=5 // pred_fallthru
      _
    %p226 = scmp.lt.s32.totalorder %s13, 2
    // Predicated region
    $region33: #{up_forward.1} parent=5 // pred_check
      %p227 = pneg %p226
    $region34: #{up_forward.1} parent=5 // pred_check_branch
      %229 = sbr.rel (%p227) target = $region36
    $region35: #{up_forward.1} parent=5 // pred_region
      // Predicated region
      $region37: #{up_forward.1} parent=35 // pred_check
        %p230 = pneg %p33
      $region38: #{up_forward.1} parent=35 // pred_check_branch
        %232 = sbr.rel (%p230) target = $region40
      $region39: #{up_forward.1} parent=35 // pred_region
        %p233 = scmp.lt.s32.totalorder %s13, 1
        %s234 = scalar_select %p233, %s13, 1
        %s235 = smul.addr %s234, 2
        %s236 = smul.addr %s235, 4
        %s237 = scalar_lea.vmem %s0, %s236
      $region40: #{up_forward.1} parent=35 // pred_fallthru
        _
      // Predicated region
      $region41: #{up_forward.1} parent=35 // pred_check
        %p238 = pneg %p59
      $region42: #{up_forward.1} parent=35 // pred_check_branch
        %240 = sbr.rel (%p238) target = $region44
      $region43: #{up_forward.1} parent=35 // pred_region
        %p241 = scmp.lt.s32.totalorder %s13, 1
        %s242 = scalar_select %p241, %s13, 1
        %s243 = smul.addr %s242, 4
        %s244 = scalar_lea.vmem %s1, %s243
      $region44: #{up_forward.1} parent=35 // pred_fallthru
        _
    $region36: #{up_forward.1} parent=5 // pred_fallthru
      _
    %p245 = scmp.le.s32.totalorder 1, %s13
    %p246 = scmp.lt.s32.totalorder %s13, 3
    %p247 = pnand %p245, %p246
    %p248 = pneg %p247
    // Predicated region
    $region45: #{up_forward.1} parent=5 // pred_check
      _
    $region46: #{up_forward.1} parent=5 // pred_check_branch
      %250 = sbr.rel (%p247) target = $region48
    $region47: #{up_forward.1} parent=5 // pred_region
      %s251 = ssub.s32 %s13, 1
      %p252 = scmp.lt.s32.totalorder %s18, 1
      %s253 = scalar_select %p252, %s18, 1
      %s254 = smul.addr %s253, 2
      %s255 = smul.addr %s254, 4
      %s256 = scalar_lea.vmem %s0, %s255
      %p257 = pneg %p39
      %p258 = pneg %p36
      %p259 = scmp.lt.s32.totalorder %s18, 1
      %s260 = scalar_select %p259, %s18, 1
      %s261 = smul.addr %s260, 4
      %s262 = scalar_lea.vmem %s1, %s261
      %p263 = pneg %p65
      %p264 = pneg %p62
      %p265 = pneg %p86
      %p266 = pneg %p83
      %p267 = pneg %p107
      %p268 = pneg %p104
      %p269 = pneg %p128
      %p270 = pneg %p125
      %p271 = pneg %p149
      %p272 = pneg %p146
      %p273 = pneg %p170
      %p274 = pneg %p167
      %p275 = pneg %p196
      %p276 = pneg %p193
      %p277 = scmp.lt.s32.totalorder %s18, 1
      %s278 = scalar_select %p277, %s18, 1
      %s279 = smul.addr %s278, 2
      %s280 = smul.addr %s279, 8
      %s281 = scalar_lea.vmem %s7, %s280
      %p282 = scmp.lt.s32.totalorder %s18, 1
      %s283 = scalar_select %p282, %s18, 1
      %s284 = smul.addr %s283, 2
      %s285 = smul.addr %s284, 4
      %s286 = scalar_lea.vmem %s0, %s285
      %p287 = scmp.lt.s32.totalorder %s18, 1
      %s288 = scalar_select %p287, %s18, 1
      %s289 = smul.addr %s288, 4
      %s290 = scalar_lea.vmem %s1, %s289
      %p291 = scmp.lt.s32.totalorder %s18, 1
      %s292 = scalar_select %p291, %s18, 1
      %s293 = smul.addr %s292, 2
      %s294 = smul.addr %s293, 8
      %s295 = scalar_lea.vmem %s7, %s294
      %v296 = vld [vmem:[%s290] sm:$0xf]
      %v297 = vld [vmem:[%s2] sm:$0xff]
      %v298 = vld [vmem:[%s2 + $0x8] sm:$0xff]
      %v299 = vld [vmem:[%s2 + $0x10] sm:$0xff]
      %v300 = vld [vmem:[%s2 + $0x18] sm:$0xff]
      %v301 = vld [vmem:[%s2 + $0x20] sm:$0xff]
      %v302 = vld [vmem:[%s2 + $0x28] sm:$0xff]
      %v303 = vld [vmem:[%s2 + $0x30] sm:$0xff]
      %v304 = vld [vmem:[%s2 + $0x38] sm:$0xff]
      %v305 = vld [vmem:[%s2 + $0x40] sm:$0xff]
      %v306 = vld [vmem:[%s2 + $0x48] sm:$0xff]
      %v307 = vld [vmem:[%s2 + $0x50] sm:$0xff]
      %v308 = vld [vmem:[%s2 + $0x58] sm:$0xff]
      %v309 = vld [vmem:[%s2 + $0x60] sm:$0x1]
      %v310 = vld [vmem:[%s2 + $0x68] sm:$0x1]
      %vm311 = vcmask 400384
      %v313 = vsel %vm311, %v296, 0
      %vm315 = vcmask 1040384
      %v317 = vsel %vm315, %v309, 0
      %v320 = vsel %vm315, %v310, 0
      %322 = vmatprep.subr.mxu0 %v298
      %323 = vmatpush1.msra.mxu0 %v297
      %324 = vmatprep.subr.mxu0 %v300
      %325 = vmatpush1.msra.mxu0 %v299
      %326 = vmatprep.subr.mxu0 %v302
      %327 = vmatpush1.msra.mxu0 %v301
      %328 = vmatprep.subr.mxu0 %v304
      %329 = vmatpush1.msra.mxu0 %v303
      %330 = vmatprep.subr.mxu0 %v306
      %331 = vmatpush1.msra.mxu0 %v305
      %332 = vmatprep.subr.mxu0 %v308
      %333 = vmatpush1.msra.mxu0 %v307
      %334 = vmatprep.subr.mxu0 %v320
      %335 = vmatpush1.msra.mxu0 %v317
      %336 = vmatprep.subr.mxu0 0.0
      %337 = vmatpush1.msra.mxu0 0.0
      %338 = vmatprep.subr.mxu0 0.0
      %339 = vmatpush1.msra.mxu0 0.0
      %340 = vmatprep.subr.mxu0 0.0
      %341 = vmatpush1.msra.mxu0 0.0
      %342 = vmatprep.subr.mxu0 0.0
      %343 = vmatpush1.msra.mxu0 0.0
      %344 = vmatprep.subr.mxu0 0.0
      %345 = vmatpush1.msra.mxu0 0.0
      %346 = vmatprep.subr.mxu0 0.0
      %347 = vmatpush1.msra.mxu0 0.0
      %348 = vmatprep.subr.mxu0 0.0
      %349 = vmatpush1.msra.mxu0 0.0
      %350 = vmatprep.subr.mxu0 0.0
      %351 = vmatpush1.msra.mxu0 0.0
      %352 = vmatprep.subr.mxu0 0.0
      %353 = vmatpush1.msra.mxu0 0.0
      %354 = vmatprep.subr.mxu0 0.0
      %355 = vmatpush1.msra.mxu0 0.0
      %356 = vmatprep.subr.mxu0 0.0
      %357 = vmatpush1.msra.mxu0 0.0
      %358 = vmatprep.subr.mxu0 0.0
      %359 = vmatpush1.msra.mxu0 0.0
      %360 = vmatprep.subr.mxu0 0.0
      %361 = vmatpush1.msra.mxu0 0.0
      %362 = vmatprep.subr.mxu0 0.0
      %363 = vmatpush1.msra.mxu0 0.0
      %364 = vmatprep.subr.mxu0 0.0
      %365 = vmatpush1.msra.mxu0 0.0
      %366 = vmatprep.subr.mxu0 0.0
      %367 = vmatpush1.msra.mxu0 0.0
      %368 = vmatprep.subr.mxu0 0.0
      %369 = vmatpush1.msra.mxu0 0.0
      %370 = vmatprep.subr.mxu0 0.0
      %371 = vmatpush1.msra.mxu0 0.0
      %372 = vmatprep.subr.mxu0 0.0
      %373 = vmatpush1.msra.mxu0 0.0
      %374 = vmatprep.subr.mxu0 0.0
      %375 = vmatpush1.msra.mxu0 0.0
      %376 = vmatprep.subr.mxu0 0.0
      %377 = vmatpush1.msra.mxu0 0.0
      %378 = vmatprep.subr.mxu0 0.0
      %379 = vmatpush1.msra.mxu0 0.0
      %380 = vmatprep.subr.mxu0 0.0
      %381 = vmatpush1.msra.mxu0 0.0
      %382 = vmatprep.subr.mxu0 0.0
      %383 = vmatpush1.msra.mxu0 0.0
      %384 = vmatprep.subr.mxu0 0.0
      %385 = vmatpush1.msra.mxu0 0.0
      %386 = vmatprep.mubr.f32.mxu0 0.0
      %387 = vmatmul.mubr.f32.gmra.mrb[0].mxu0 %v313
      %v388 = vpop.f32.mrb[0].mxu0
      %v389 = vadd.f32 0.0, %v388
      %v390 = vpop.f32.mrb[0].mxu0
      %v391 = vadd.f32 0.0, %v390
      %392 = vdwg.mxu0
      %v393 = vld [vmem:[%s286] sm:$0xff]
      %v395 = vcombine.high %v393, %v393
      %v399 = vrot.slane %v389, 4
      %v400 = vrot.slane %v391, 4
      %vm403 = vcmask 1043456
      %v404 = vsel %vm403, %v393, %v399
      %v405 = vsel %vm403, %v395, %v400
      %v406 = vlaneseq
      %v407 = vand.u32 %v406, 127
      %v408 = vadd.s32 %v407, 128
      %vm409 = vcmp.lt.s32.totalorder %v407, 0
      %v410 = vsub.s32 0, %v407
      %v411 = vsel %vm409, %v410, %v407
      %v412 = vshrl.u32 %v411, 4
      %v413 = vand.u32 %v411, 15
      %v414 = vsub.s32 0, %v413
      %v415 = vsel %vm409, %v414, %v413
      %vm416 = vcmp.lt.s32.totalorder %v408, 0
      %v417 = vsub.s32 0, %v408
      %v418 = vsel %vm416, %v417, %v408
      %v419 = vshrl.u32 %v418, 4
      %v420 = vand.u32 %v418, 15
      %v421 = vsub.s32 0, %v420
      %v422 = vsel %vm416, %v421, %v420
      %vm423 = vcmp.ne.s32.totalorder %v415, 0
      %vm424 = vcmp.ne.s32.totalorder %v422, 0
      %vm425 = vcmp.lt.s32.totalorder %v415, 0
      %vm426 = vcmp.lt.s32.totalorder %v422, 0
      %vm427 = vmand %vm425, %vm423
      %vm428 = vmand %vm426, %vm424
      %v429 = vadd.s32 %v415, 16
      %v430 = vadd.s32 %v422, 16
      %v431 = vsel %vm427, %v429, %v415
      %v432 = vsel %vm428, %v430, %v422
      %vm433 = vcmp.ge.s32.totalorder %v407, 16
      %vm434 = vcmp.ge.s32.totalorder %v408, 16
      %vm435 = vcmp.ge.s32.totalorder %v431, 1
      %vm436 = vcmp.ge.s32.totalorder %v432, 1
      %vm437 = vmand %vm433, %vm435
      %vm438 = vmand %vm434, %vm436
      %v439 = vsel %vm437, 1, 0
      %v440 = vsel %vm438, 1, 0
      %v441 = vcvt.s32.f32 %v439
      %v442 = vcvt.s32.f32 %v440
      %v443 = vsel %vm433, 1, 0
      %v444 = vsel %vm434, 1, 0
      %v445 = vcvt.s32.f32 %v443
      %v446 = vcvt.s32.f32 %v444
      %vm447 = vcmp.le.s32.totalorder %v431, 14
      %vm448 = vcmp.le.s32.totalorder %v432, 14
      %vm449 = vmand %vm433, %vm447
      %vm450 = vmand %vm434, %vm448
      %v451 = vsel %vm449, 1, 0
      %v452 = vsel %vm450, 1, 0
      %v453 = vcvt.s32.f32 %v451
      %v454 = vcvt.s32.f32 %v452
      %v455 = vsel %vm435, 1, 0
      %v456 = vsel %vm436, 1, 0
      %v457 = vcvt.s32.f32 %v455
      %v458 = vcvt.s32.f32 %v456
      %v459 = vsel %vm447, 1, 0
      %v460 = vsel %vm448, 1, 0
      %v461 = vcvt.s32.f32 %v459
      %v462 = vcvt.s32.f32 %v460
      %vm463 = vcmp.lt.s32.totalorder %v407, 240
      %vm464 = vcmp.lt.s32.totalorder %v408, 240
      %vm465 = vmand %vm463, %vm435
      %vm466 = vmand %vm464, %vm436
      %v467 = vsel %vm465, 1, 0
      %v468 = vsel %vm466, 1, 0
      %v469 = vcvt.s32.f32 %v467
      %v470 = vcvt.s32.f32 %v468
      %v471 = vsel %vm463, 1, 0
      %v472 = vsel %vm464, 1, 0
      %v473 = vcvt.s32.f32 %v471
      %v474 = vcvt.s32.f32 %v472
      %vm475 = vmand %vm463, %vm447
      %vm476 = vmand %vm464, %vm448
      %v477 = vsel %vm475, 1, 0
      %v478 = vsel %vm476, 1, 0
      %v479 = vcvt.s32.f32 %v477
      %v480 = vcvt.s32.f32 %v478
      %v481 = vld [vmem:[%s3] sm:$0xff]
      %482 = vrot.lane.b32.xlu0 %v404, 17
      %v483 = vpop.permute.xlu0 %482
      %484 = vrot.lane.b32.xlu0 %v405, 17
      %v485 = vpop.permute.xlu0 %484
      %vm486 = vcmp.lt.s32.totalorder %v407, 17
      %v487 = vsel %vm486, %v483, %v485
      %v488 = vsel %vm486, %v485, %v483
      %v489 = vmul.f32 %v488, %v441
      %v490 = vmul.f32 %v487, %v442
      %491 = vrot.lane.b32.xlu0 %v404, 16
      %v492 = vpop.permute.xlu0 %491
      %493 = vrot.lane.b32.xlu0 %v405, 16
      %v494 = vpop.permute.xlu0 %493
      %vm495 = vcmp.lt.s32.totalorder %v407, 16
      %v496 = vsel %vm495, %v492, %v494
      %v497 = vsel %vm495, %v494, %v492
      %v498 = vmul.f32 %v497, %v445
      %v499 = vmul.f32 %v496, %v446
      %500 = vrot.lane.b32.xlu0 %v404, 15
      %v501 = vpop.permute.xlu0 %500
      %502 = vrot.lane.b32.xlu0 %v405, 15
      %v503 = vpop.permute.xlu0 %502
      %vm504 = vcmp.lt.s32.totalorder %v407, 15
      %v505 = vsel %vm504, %v501, %v503
      %v506 = vsel %vm504, %v503, %v501
      %v507 = vmul.f32 %v506, %v453
      %v508 = vmul.f32 %v505, %v454
      %509 = vrot.lane.b32.xlu0 %v404, 1
      %v510 = vpop.permute.xlu0 %509
      %511 = vrot.lane.b32.xlu0 %v405, 1
      %v512 = vpop.permute.xlu0 %511
      %vm513 = vcmp.lt.s32.totalorder %v407, 1
      %v514 = vsel %vm513, %v510, %v512
      %v515 = vsel %vm513, %v512, %v510
      %v516 = vmul.f32 %v515, %v457
      %v517 = vmul.f32 %v514, %v458
      %518 = vrot.lane.b32.xlu0 %v404, 127
      %v519 = vpop.permute.xlu0 %518
      %520 = vrot.lane.b32.xlu0 %v405, 127
      %v521 = vpop.permute.xlu0 %520
      %vm522 = vcmp.lt.s32.totalorder %v407, 127
      %v523 = vsel %vm522, %v519, %v521
      %v524 = vsel %vm522, %v521, %v519
      %v525 = vmul.f32 %v523, %v461
      %v526 = vmul.f32 %v524, %v462
      %527 = vrot.lane.b32.xlu0 %v404, 113
      %v528 = vpop.permute.xlu0 %527
      %529 = vrot.lane.b32.xlu0 %v405, 113
      %v530 = vpop.permute.xlu0 %529
      %vm531 = vcmp.lt.s32.totalorder %v407, 113
      %v532 = vsel %vm531, %v528, %v530
      %v533 = vsel %vm531, %v530, %v528
      %v534 = vmul.f32 %v532, %v469
      %v535 = vmul.f32 %v533, %v470
      %536 = vrot.lane.b32.xlu0 %v404, 112
      %v537 = vpop.permute.xlu0 %536
      %538 = vrot.lane.b32.xlu0 %v405, 112
      %v539 = vpop.permute.xlu0 %538
      %vm540 = vcmp.lt.s32.totalorder %v407, 112
      %v541 = vsel %vm540, %v537, %v539
      %v542 = vsel %vm540, %v539, %v537
      %v543 = vmul.f32 %v541, %v473
      %v544 = vmul.f32 %v542, %v474
      %545 = vrot.lane.b32.xlu0 %v404, 111
      %v546 = vpop.permute.xlu0 %545
      %547 = vrot.lane.b32.xlu0 %v405, 111
      %v548 = vpop.permute.xlu0 %547
      %vm549 = vcmp.lt.s32.totalorder %v407, 111
      %v550 = vsel %vm549, %v546, %v548
      %v551 = vsel %vm549, %v548, %v546
      %v552 = vmul.f32 %v550, %v479
      %v553 = vmul.f32 %v551, %v480
      %v554 = vld [vmem:[%s4] sm:$0xff]
      %556 = vset.pattern.permute.xlu0 0
      %557 = vperm.xlu0 %556, %v554
      %v558 = vpop.permute.xlu0 %557
      %vm560 = vcmask 588800
      %v562 = vsel %vm560, %v481, 0
      %564 = vmatprep.subr.mxu0 %v490
      %565 = vmatpush1.msra.mxu0 %v489
      %566 = vmatprep.subr.mxu0 %v499
      %567 = vmatpush1.msra.mxu0 %v498
      %568 = vmatprep.subr.mxu0 %v508
      %569 = vmatpush1.msra.mxu0 %v507
      %570 = vmatprep.subr.mxu0 %v517
      %571 = vmatpush1.msra.mxu0 %v516
      %572 = vmatprep.subr.mxu0 %v405
      %573 = vmatpush1.msra.mxu0 %v404
      %574 = vmatprep.subr.mxu0 %v526
      %575 = vmatpush1.msra.mxu0 %v525
      %576 = vmatprep.subr.mxu0 %v535
      %577 = vmatpush1.msra.mxu0 %v534
      %578 = vmatprep.subr.mxu0 %v544
      %579 = vmatpush1.msra.mxu0 %v543
      %580 = vmatprep.subr.mxu0 %v553
      %581 = vmatpush1.msra.mxu0 %v552
      %582 = vmatprep.subr.mxu0 0.0
      %583 = vmatpush1.msra.mxu0 0.0
      %584 = vmatprep.subr.mxu0 0.0
      %585 = vmatpush1.msra.mxu0 0.0
      %586 = vmatprep.subr.mxu0 0.0
      %587 = vmatpush1.msra.mxu0 0.0
      %588 = vmatprep.subr.mxu0 0.0
      %589 = vmatpush1.msra.mxu0 0.0
      %590 = vmatprep.subr.mxu0 0.0
      %591 = vmatpush1.msra.mxu0 0.0
      %592 = vmatprep.subr.mxu0 0.0
      %593 = vmatpush1.msra.mxu0 0.0
      %594 = vmatprep.subr.mxu0 0.0
      %595 = vmatpush1.msra.mxu0 0.0
      %596 = vmatprep.subr.mxu0 0.0
      %597 = vmatpush1.msra.mxu0 0.0
      %598 = vmatprep.subr.mxu0 0.0
      %599 = vmatpush1.msra.mxu0 0.0
      %600 = vmatprep.subr.mxu0 0.0
      %601 = vmatpush1.msra.mxu0 0.0
      %602 = vmatprep.subr.mxu0 0.0
      %603 = vmatpush1.msra.mxu0 0.0
      %604 = vmatprep.subr.mxu0 0.0
      %605 = vmatpush1.msra.mxu0 0.0
      %606 = vmatprep.subr.mxu0 0.0
      %607 = vmatpush1.msra.mxu0 0.0
      %608 = vmatprep.subr.mxu0 0.0
      %609 = vmatpush1.msra.mxu0 0.0
      %610 = vmatprep.subr.mxu0 0.0
      %611 = vmatpush1.msra.mxu0 0.0
      %612 = vmatprep.subr.mxu0 0.0
      %613 = vmatpush1.msra.mxu0 0.0
      %614 = vmatprep.subr.mxu0 0.0
      %615 = vmatpush1.msra.mxu0 0.0
      %616 = vmatprep.subr.mxu0 0.0
      %617 = vmatpush1.msra.mxu0 0.0
      %618 = vmatprep.subr.mxu0 0.0
      %619 = vmatpush1.msra.mxu0 0.0
      %620 = vmatprep.subr.mxu0 0.0
      %621 = vmatpush1.msra.mxu0 0.0
      %622 = vmatprep.subr.mxu0 0.0
      %623 = vmatpush1.msra.mxu0 0.0
      %624 = vmatprep.subr.mxu0 0.0
      %625 = vmatpush1.msra.mxu0 0.0
      %626 = vmatprep.subr.mxu0 0.0
      %627 = vmatpush1.msra.mxu0 0.0
      %628 = vmatprep.mubr.f32.mxu0 0.0
      %629 = vmatmul.mubr.f32.gmra.mrb[0].mxu0 %v562
      %v630 = vpop.f32.mrb[0].mxu0
      %v631 = vadd.f32 %v558, %v630
      %v632 = vpop.f32.mrb[0].mxu0
      %v633 = vadd.f32 %v558, %v632
      %634 = vdwg.mxu0
      %v635 = vmax.f32 %v631, 0.0
      %v636 = vmax.f32 %v633, 0.0
      %v637 = vld [vmem:[%s5] sm:$0xff]
      %638 = vrot.lane.b32.xlu0 %v635, 17
      %v639 = vpop.permute.xlu0 %638
      %640 = vrot.lane.b32.xlu0 %v636, 17
      %v641 = vpop.permute.xlu0 %640
      %v642 = vsel %vm486, %v639, %v641
      %v643 = vsel %vm486, %v641, %v639
      %v644 = vmul.f32 %v643, %v441
      %v645 = vmul.f32 %v642, %v442
      %646 = vrot.lane.b32.xlu0 %v635, 16
      %v647 = vpop.permute.xlu0 %646
      %648 = vrot.lane.b32.xlu0 %v636, 16
      %v649 = vpop.permute.xlu0 %648
      %v650 = vsel %vm495, %v647, %v649
      %v651 = vsel %vm495, %v649, %v647
      %v652 = vmul.f32 %v651, %v445
      %v653 = vmul.f32 %v650, %v446
      %654 = vrot.lane.b32.xlu0 %v635, 15
      %v655 = vpop.permute.xlu0 %654
      %656 = vrot.lane.b32.xlu0 %v636, 15
      %v657 = vpop.permute.xlu0 %656
      %v658 = vsel %vm504, %v655, %v657
      %v659 = vsel %vm504, %v657, %v655
      %v660 = vmul.f32 %v659, %v453
      %v661 = vmul.f32 %v658, %v454
      %662 = vrot.lane.b32.xlu0 %v635, 1
      %v663 = vpop.permute.xlu0 %662
      %664 = vrot.lane.b32.xlu0 %v636, 1
      %v665 = vpop.permute.xlu0 %664
      %v666 = vsel %vm513, %v663, %v665
      %v667 = vsel %vm513, %v665, %v663
      %v668 = vmul.f32 %v667, %v457
      %v669 = vmul.f32 %v666, %v458
      %670 = vrot.lane.b32.xlu0 %v635, 127
      %v671 = vpop.permute.xlu0 %670
      %672 = vrot.lane.b32.xlu0 %v636, 127
      %v673 = vpop.permute.xlu0 %672
      %v674 = vsel %vm522, %v671, %v673
      %v675 = vsel %vm522, %v673, %v671
      %v676 = vmul.f32 %v674, %v461
      %v677 = vmul.f32 %v675, %v462
      %678 = vrot.lane.b32.xlu0 %v635, 113
      %v679 = vpop.permute.xlu0 %678
      %680 = vrot.lane.b32.xlu0 %v636, 113
      %v681 = vpop.permute.xlu0 %680
      %v682 = vsel %vm531, %v679, %v681
      %v683 = vsel %vm531, %v681, %v679
      %v684 = vmul.f32 %v682, %v469
      %v685 = vmul.f32 %v683, %v470
      %686 = vrot.lane.b32.xlu0 %v635, 112
      %v687 = vpop.permute.xlu0 %686
      %688 = vrot.lane.b32.xlu0 %v636, 112
      %v689 = vpop.permute.xlu0 %688
      %v690 = vsel %vm540, %v687, %v689
      %v691 = vsel %vm540, %v689, %v687
      %v692 = vmul.f32 %v690, %v473
      %v693 = vmul.f32 %v691, %v474
      %694 = vrot.lane.b32.xlu0 %v635, 111
      %v695 = vpop.permute.xlu0 %694
      %696 = vrot.lane.b32.xlu0 %v636, 111
      %v697 = vpop.permute.xlu0 %696
      %v698 = vsel %vm549, %v695, %v697
      %v699 = vsel %vm549, %v697, %v695
      %v700 = vmul.f32 %v698, %v479
      %v701 = vmul.f32 %v699, %v480
      %v702 = vld [vmem:[%s6] sm:$0xff]
      %704 = vset.pattern.permute.xlu0 0
      %705 = vperm.xlu0 %704, %v702
      %v706 = vpop.permute.xlu0 %705
      %v709 = vsel %vm560, %v637, 0
      %711 = vmatprep.subr.mxu0 %v645
      %712 = vmatpush1.msra.mxu0 %v644
      %713 = vmatprep.subr.mxu0 %v653
      %714 = vmatpush1.msra.mxu0 %v652
      %715 = vmatprep.subr.mxu0 %v661
      %716 = vmatpush1.msra.mxu0 %v660
      %717 = vmatprep.subr.mxu0 %v669
      %718 = vmatpush1.msra.mxu0 %v668
      %719 = vmatprep.subr.mxu0 %v636
      %720 = vmatpush1.msra.mxu0 %v635
      %721 = vmatprep.subr.mxu0 %v677
      %722 = vmatpush1.msra.mxu0 %v676
      %723 = vmatprep.subr.mxu0 %v685
      %724 = vmatpush1.msra.mxu0 %v684
      %725 = vmatprep.subr.mxu0 %v693
      %726 = vmatpush1.msra.mxu0 %v692
      %727 = vmatprep.subr.mxu0 %v701
      %728 = vmatpush1.msra.mxu0 %v700
      %729 = vmatprep.subr.mxu0 0.0
      %730 = vmatpush1.msra.mxu0 0.0
      %731 = vmatprep.subr.mxu0 0.0
      %732 = vmatpush1.msra.mxu0 0.0
      %733 = vmatprep.subr.mxu0 0.0
      %734 = vmatpush1.msra.mxu0 0.0
      %735 = vmatprep.subr.mxu0 0.0
      %736 = vmatpush1.msra.mxu0 0.0
      %737 = vmatprep.subr.mxu0 0.0
      %738 = vmatpush1.msra.mxu0 0.0
      %739 = vmatprep.subr.mxu0 0.0
      %740 = vmatpush1.msra.mxu0 0.0
      %741 = vmatprep.subr.mxu0 0.0
      %742 = vmatpush1.msra.mxu0 0.0
      %743 = vmatprep.subr.mxu0 0.0
      %744 = vmatpush1.msra.mxu0 0.0
      %745 = vmatprep.subr.mxu0 0.0
      %746 = vmatpush1.msra.mxu0 0.0
      %747 = vmatprep.subr.mxu0 0.0
      %748 = vmatpush1.msra.mxu0 0.0
      %749 = vmatprep.subr.mxu0 0.0
      %750 = vmatpush1.msra.mxu0 0.0
      %751 = vmatprep.subr.mxu0 0.0
      %752 = vmatpush1.msra.mxu0 0.0
      %753 = vmatprep.subr.mxu0 0.0
      %754 = vmatpush1.msra.mxu0 0.0
      %755 = vmatprep.subr.mxu0 0.0
      %756 = vmatpush1.msra.mxu0 0.0
      %757 = vmatprep.subr.mxu0 0.0
      %758 = vmatpush1.msra.mxu0 0.0
      %759 = vmatprep.subr.mxu0 0.0
      %760 = vmatpush1.msra.mxu0 0.0
      %761 = vmatprep.subr.mxu0 0.0
      %762 = vmatpush1.msra.mxu0 0.0
      %763 = vmatprep.subr.mxu0 0.0
      %764 = vmatpush1.msra.mxu0 0.0
      %765 = vmatprep.subr.mxu0 0.0
      %766 = vmatpush1.msra.mxu0 0.0
      %767 = vmatprep.subr.mxu0 0.0
      %768 = vmatpush1.msra.mxu0 0.0
      %769 = vmatprep.subr.mxu0 0.0
      %770 = vmatpush1.msra.mxu0 0.0
      %771 = vmatprep.subr.mxu0 0.0
      %772 = vmatpush1.msra.mxu0 0.0
      %773 = vmatprep.subr.mxu0 0.0
      %774 = vmatpush1.msra.mxu0 0.0
      %775 = vmatprep.mubr.f32.mxu0 0.0
      %776 = vmatmul.mubr.f32.gmra.mrb[0].mxu0 %v709
      %v777 = vpop.f32.mrb[0].mxu0
      %v778 = vadd.f32 %v706, %v777
      %v779 = vpop.f32.mrb[0].mxu0
      %v780 = vadd.f32 %v706, %v779
      %781 = vdwg.mxu0
      %v782 = vmax.f32 %v778, 0.0
      %v783 = vmax.f32 %v780, 0.0
      %784 = vst [vmem:[%s295] sm:$0xff] %v782
      %785 = vst [vmem:[%s295 + $0x8] sm:$0xff] %v783
      %p786 = scmp.lt.s32.totalorder %s18, 1
      %s787 = scalar_select %p786, %s18, 1
      %s788 = smul.addr %s787, 2
      %s789 = smul.addr %s788, 8
      %s790 = scalar_lea.vmem %s7, %s789
      // Predicated region
      $region49: #{up_forward.1} parent=47 // pred_check
        %p791 = pneg %p193
      $region50: #{up_forward.1} parent=47 // pred_check_branch
        %793 = sbr.rel (%p791) target = $region52
      $region51: #{up_forward.1} parent=47 // pred_region
        _
      $region52: #{up_forward.1} parent=47 // pred_fallthru
        _
    $region48: #{up_forward.1} parent=5 // pred_fallthru
      _
    %p794 = scmp.le.s32.totalorder 2, %s13
    // Predicated region
    $region53: #{up_forward.1} parent=5 // pred_check
      %p795 = pneg %p794
    $region54: #{up_forward.1} parent=5 // pred_check_branch
      %797 = sbr.rel (%p795) target = $region56
    $region55: #{up_forward.1} parent=5 // pred_region
      %s798 = ssub.s32 %s13, 2
      // Predicated region
      $region57: #{up_forward.1} parent=55 // pred_check
        %p799 = pneg %p199
      $region58: #{up_forward.1} parent=55 // pred_check_branch
        %801 = sbr.rel (%p799) target = $region60
      $region59: #{up_forward.1} parent=55 // pred_region
        %p802 = scmp.lt.s32.totalorder %s19, 1
        %s803 = scalar_select %p802, %s19, 1
        %s804 = smul.addr %s803, 2
        %s805 = smul.addr %s804, 8
        %s806 = scalar_lea.vmem %s7, %s805
      $region60: #{up_forward.1} parent=55 // pred_fallthru
        _
    $region56: #{up_forward.1} parent=5 // pred_fallthru
      _
  $region6: #{up_forward.1} parent=0 // loop_footer
    %s17 = sadd.s32 1, %s13
  $region7: #{up_forward.1} parent=0 // loop_footer_branch
    %12 = sbr.rel target = $region3
  $region8: #{up_forward.1} parent=0 // loop_exit
    _

</llo_original>
